<compile_context>
chip_gen: v7x
topology: tpu7x:2x2x1
jax: 0.10.0
libtpu: 0.0.40
codegen_flags: <defaults>
</compile_context>

<pallas_src>
import functools

import jax
import jax.numpy as jnp
from jax.experimental import pallas as pl
from jax.experimental.pallas import tpu as pltpu

EPS = 1e-5  # PyTorch nn.LayerNorm default


def _prenorm_linear_kernel(x_ref, g_ref, b_ref, w_ref, wb_ref, o_ref, y_ref):
    # x_ref : (TM, D)   row tile (rows = flattened B*S)
    # g_ref : (1, D) gamma, b_ref: (1, D) beta    (LayerNorm affine)
    # w_ref : (D, TN), wb_ref: (1, TN)            (fn = Linear, H padded to 128)
    # o_ref : (TM, TN)
    # y_ref : (TM, D) VMEM scratch -- normalized rows, cached across H tiles
    j = pl.program_id(1)

    # Normalize once per row tile (j == 0); reuse the cached result for j > 0.
    @pl.when(j == 0)
    def _():
        x = x_ref[...].astype(jnp.float32)                    # (TM, D) f32 stats
        d = x.shape[-1]
        # Single-pass statistics: two independent reductions off the loaded tile.
        s = jnp.sum(x, axis=-1, keepdims=True)                # (TM, 1)
        ss = jnp.sum(x * x, axis=-1, keepdims=True)           # (TM, 1)
        mean = s * (1.0 / d)
        var = jnp.maximum(ss * (1.0 / d) - mean * mean, 0.0)  # biased, like torch
        inv = jax.lax.rsqrt(var + EPS)
        y = (x - mean) * inv                                  # (TM, D)
        y = y * g_ref[...].astype(jnp.float32) + b_ref[...].astype(jnp.float32)
        y_ref[...] = y.astype(y_ref.dtype)                    # MXU input dtype

    # fn: Linear(D -> TN slice).  MXU operands in the weight dtype, f32 acc.
    out = jnp.dot(y_ref[...], w_ref[...],
                  preferred_element_type=jnp.float32)         # (TM, TN)
    out = out + wb_ref[...].astype(jnp.float32)
    o_ref[...] = out.astype(o_ref.dtype)


def _round_up(v, m):
    return (v + m - 1) // m * m


@functools.partial(jax.jit, static_argnames=("tm", "tn"))
def prenorm_linear(x, gamma, beta, w, wb, *, tm=256, tn=512):
    B, S, D = x.shape
    H = w.shape[1]

    # Lane-dense output: pad H up to a multiple of 128 (avoids masked vst.msk).
    Hp = _round_up(H, 128)
    if Hp != H:
        w = jnp.pad(w, ((0, 0), (0, Hp - H)))
        wb = jnp.pad(wb, ((0, Hp - H),))

    # LayerNorm rows are independent -> flatten (B, S) into one row axis.
    R = B * S
    x2 = x.reshape(R, D)

    # Row tile: multiple of 8 (tm is) or the full R, so the (8,128) rule holds.
    TM = R if R <= tm else tm
    # Feature tile: multiple of 128 (Hp and tn are) or the full Hp.
    TN = Hp if Hp <= tn else tn
    n_r = pl.cdiv(R, TM)
    n_h = pl.cdiv(Hp, TN)

    gamma2 = gamma.reshape(1, D)
    beta2 = beta.reshape(1, D)
    wb2 = wb.reshape(1, Hp)

    # Scoped-VMEM sizing: double-buffered x/out/weight tiles + the normalized
    # scratch + f32 in-kernel temporaries, with 2x margin; clamped to stay
    # within v7x's 64 MiB physical VMEM.
    xi = x.dtype.itemsize
    wi = w.dtype.itemsize
    est = (2 * TM * D * xi               # x tile, double-buffered
           + 2 * TM * TN * xi            # out tile, double-buffered
           + 2 * D * TN * wi             # weight tile, double-buffered
           + 2 * TN * 4 + 4 * D * 4      # bias + gamma/beta
           + TM * D * wi                 # normalized-row scratch
           + 4 * TM * max(D, TN) * 4)    # f32 temporaries
    vmem_limit = int(min(max(2 * est, 32 * 1024 * 1024), 64 * 1024 * 1024))

    out = pl.pallas_call(
        _prenorm_linear_kernel,
        out_shape=jax.ShapeDtypeStruct((R, Hp), x.dtype),
        grid_spec=pltpu.PrefetchScalarGridSpec(
            num_scalar_prefetch=0,
            grid=(n_r, n_h),
            in_specs=[
                # x ignores j -> the same row tile is not re-DMA'd across H tiles.
                pl.BlockSpec((TM, D), lambda i, j: (i, 0)),
                # LayerNorm params stay resident (constant index_map).
                pl.BlockSpec((1, D), lambda i, j: (0, 0)),
                pl.BlockSpec((1, D), lambda i, j: (0, 0)),
                # Weight / bias slices follow the H tile.
                pl.BlockSpec((D, TN), lambda i, j: (0, j)),
                pl.BlockSpec((1, TN), lambda i, j: (0, j)),
            ],
            out_specs=pl.BlockSpec((TM, TN), lambda i, j: (i, j)),
            scratch_shapes=[pltpu.VMEM((TM, D), w.dtype)],
        ),
        compiler_params=pltpu.CompilerParams(
            dimension_semantics=("parallel", "arbitrary"),
            vmem_limit_bytes=vmem_limit),
    )(x2, gamma2, beta2, w, wb2)

    # Plain-JAX glue: un-flatten rows and strip the lane padding back off.
    out = out.reshape(B, S, Hp)
    return out[:, :, :H] if Hp != H else out


def prenorm_linear_ref(x, gamma, beta, w, wb):
    xf = x.astype(jnp.float32)
    mean = jnp.mean(xf, axis=-1, keepdims=True)
    var = jnp.mean((xf - mean) ** 2, axis=-1, keepdims=True)
    y = (xf - mean) * jax.lax.rsqrt(var + EPS) * gamma + beta
    return (y @ w.astype(jnp.float32) + wb).astype(x.dtype)


if __name__ == "__main__":
    key = jax.random.PRNGKey(0)
    B, S, D, H = 2, 8, 32, 32

    kx, kw = jax.random.split(key)
    x = jax.random.normal(kx, (B, S, D), dtype=jnp.float32)

    # LayerNorm params: PyTorch default init (weight=1, bias=0).
    gamma = jnp.ones((D,), dtype=jnp.float32)
    beta = jnp.zeros((D,), dtype=jnp.float32)

    # fn = Linear(D, H): deterministic random weights, zero bias.
    # TODO(synk): PreNorm wraps an arbitrary `fn`; a Linear is used here as the
    # fused fn — other fns would each need their own fused kernel.
    w = jax.random.normal(kw, (D, H), dtype=jnp.float32) * 0.1
    wb = jnp.zeros((H,), dtype=jnp.float32)

    out = prenorm_linear(x, gamma, beta, w, wb)
    out = jax.block_until_ready(out)

    ref = prenorm_linear_ref(x, gamma, beta, w, wb)
    assert out.shape == (B, S, H)
    assert jnp.allclose(out, ref, atol=1e-4, rtol=1e-4)
    print("KERNEL_OK")
</pallas_src>

<mosaic_0001>
module attributes {stable_mosaic.version = 11 : i64} {
  func.func @_prenorm_linear_kernel(%arg0: i32, %arg1: i32, %arg2: memref<16x32xf32, #tpu.memory_space<vmem>>, %arg3: memref<1x32xf32, #tpu.memory_space<vmem>>, %arg4: memref<1x32xf32, #tpu.memory_space<vmem>>, %arg5: memref<32x128xf32, #tpu.memory_space<vmem>>, %arg6: memref<1x128xf32, #tpu.memory_space<vmem>>, %arg7: memref<16x128xf32, #tpu.memory_space<vmem>>, %arg8: memref<16x32xf32, #tpu.memory_space<vmem>>) attributes {dimension_semantics = [#tpu.dimension_semantics<parallel>, #tpu.dimension_semantics<arbitrary>], iteration_bounds = array<i64: 1, 1>, scalar_prefetch = 0 : i64, scratch_operands = 1 : i64, tpu.core_type = #tpu.core_type<tc>, window_params = [{transform_indices = @transform_0, window_bounds = array<i64: 16, 32>}, {pipeline_mode = #tpu.pipeline_mode<synchronous>, transform_indices = @transform_1, window_bounds = array<i64: 1, 32>}, {pipeline_mode = #tpu.pipeline_mode<synchronous>, transform_indices = @transform_2, window_bounds = array<i64: 1, 32>}, {transform_indices = @transform_3, window_bounds = array<i64: 32, 128>}, {transform_indices = @transform_4, window_bounds = array<i64: 1, 128>}, {transform_indices = @transform_5, window_bounds = array<i64: 16, 128>}]} {
    %c0_i32 = arith.constant 0 : i32
    %0 = arith.cmpi eq, %arg1, %c0_i32 : i32
    %1 = arith.extui %0 : i1 to i32
    %c0_i32_0 = arith.constant 0 : i32
    %2 = arith.cmpi ne, %1, %c0_i32_0 : i32
    scf.if %2 {
      %c0_8 = arith.constant 0 : index
      %c0_9 = arith.constant 0 : index
      %10 = vector.load %arg2[%c0_8, %c0_9] : memref<16x32xf32, #tpu.memory_space<vmem>>, vector<16x32xf32>
      %cst_10 = arith.constant dense<0.000000e+00> : vector<16xf32>
      %11 = vector.multi_reduction <add>, %10, %cst_10 [1] : vector<16x32xf32> to vector<16xf32>
      %12 = vector.shape_cast %11 : vector<16xf32> to vector<16x1xf32>
      %13 = arith.mulf %10, %10 : vector<16x32xf32>
      %cst_11 = arith.constant dense<0.000000e+00> : vector<16xf32>
      %14 = vector.multi_reduction <add>, %13, %cst_11 [1] : vector<16x32xf32> to vector<16xf32>
      %15 = vector.shape_cast %14 : vector<16xf32> to vector<16x1xf32>
      %cst_12 = arith.constant 3.125000e-02 : f32
      %16 = vector.broadcast %cst_12 : f32 to vector<16x1xf32>
      %17 = arith.mulf %12, %16 : vector<16x1xf32>
      %cst_13 = arith.constant 3.125000e-02 : f32
      %18 = vector.broadcast %cst_13 : f32 to vector<16x1xf32>
      %19 = arith.mulf %15, %18 : vector<16x1xf32>
      %20 = arith.mulf %17, %17 : vector<16x1xf32>
      %21 = arith.subf %19, %20 : vector<16x1xf32>
      %cst_14 = arith.constant 0.000000e+00 : f32
      %22 = vector.broadcast %cst_14 : f32 to vector<16x1xf32>
      %23 = arith.maximumf %21, %22 : vector<16x1xf32>
      %cst_15 = arith.constant 9.99999974E-6 : f32
      %24 = vector.broadcast %cst_15 : f32 to vector<16x1xf32>
      %25 = arith.addf %23, %24 : vector<16x1xf32>
      %26 = math.rsqrt %25 : vector<16x1xf32>
      %27 = vector.broadcast %17 : vector<16x1xf32> to vector<16x32xf32>
      %28 = arith.subf %10, %27 : vector<16x32xf32>
      %29 = vector.broadcast %26 : vector<16x1xf32> to vector<16x32xf32>
      %30 = arith.mulf %28, %29 : vector<16x32xf32>
      %c0_16 = arith.constant 0 : index
      %c0_17 = arith.constant 0 : index
      %31 = vector.load %arg3[%c0_16, %c0_17] : memref<1x32xf32, #tpu.memory_space<vmem>>, vector<1x32xf32>
      %32 = vector.broadcast %31 : vector<1x32xf32> to vector<16x32xf32>
      %33 = arith.mulf %30, %32 : vector<16x32xf32>
      %c0_18 = arith.constant 0 : index
      %c0_19 = arith.constant 0 : index
      %34 = vector.load %arg4[%c0_18, %c0_19] : memref<1x32xf32, #tpu.memory_space<vmem>>, vector<1x32xf32>
      %35 = vector.broadcast %34 : vector<1x32xf32> to vector<16x32xf32>
      %36 = arith.addf %33, %35 : vector<16x32xf32>
      %c0_20 = arith.constant 0 : index
      %c0_21 = arith.constant 0 : index
      %37 = vector.load %arg8[%c0_20, %c0_21] : memref<16x32xf32, #tpu.memory_space<vmem>>, vector<16x32xf32>
      tpu.vector_store %arg8[%c0_20, %c0_21], %36 {strides = array<i32>} : memref<16x32xf32, #tpu.memory_space<vmem>>, vector<16x32xf32>,
    } else {
    }
    %c0 = arith.constant 0 : index
    %c0_1 = arith.constant 0 : index
    %3 = vector.load %arg8[%c0, %c0_1] : memref<16x32xf32, #tpu.memory_space<vmem>>, vector<16x32xf32>
    %c0_2 = arith.constant 0 : index
    %c0_3 = arith.constant 0 : index
    %4 = vector.load %arg5[%c0_2, %c0_3] : memref<32x128xf32, #tpu.memory_space<vmem>>, vector<32x128xf32>
    %cst = arith.constant dense<0.000000e+00> : vector<16x128xf32>
    %5 = tpu.matmul %3, %4, %cst {dimension_numbers = #tpu.dot_dimension_numbers<[1], [0], [0], [1], [0, 0, 1, 1], [], []>} : vector<16x32xf32>, vector<32x128xf32>, vector<16x128xf32> -> vector<16x128xf32>
    %c0_4 = arith.constant 0 : index
    %c0_5 = arith.constant 0 : index
    %6 = vector.load %arg6[%c0_4, %c0_5] : memref<1x128xf32, #tpu.memory_space<vmem>>, vector<1x128xf32>
    %7 = vector.broadcast %6 : vector<1x128xf32> to vector<16x128xf32>
    %8 = arith.addf %5, %7 : vector<16x128xf32>
    %c0_6 = arith.constant 0 : index
    %c0_7 = arith.constant 0 : index
    %9 = vector.load %arg7[%c0_6, %c0_7] : memref<16x128xf32, #tpu.memory_space<vmem>>, vector<16x128xf32>
    tpu.vector_store %arg7[%c0_6, %c0_7], %8 {strides = array<i32>} : memref<16x128xf32, #tpu.memory_space<vmem>>, vector<16x128xf32>,
    return
  }
  func.func @transform_0(%arg0: i32, %arg1: i32) -> (i32, i32) {
    %c0_i32 = arith.constant 0 : i32
    %c0_i32_0 = arith.constant 0 : i32
    return %arg0, %c0_i32 : i32, i32
  }
  func.func @transform_1(%arg0: i32, %arg1: i32) -> (i32, i32) {
    %c0_i32 = arith.constant 0 : i32
    %c0_i32_0 = arith.constant 0 : i32
    %c0_i32_1 = arith.constant 0 : i32
    return %c0_i32, %c0_i32_0 : i32, i32
  }
  func.func @transform_2(%arg0: i32, %arg1: i32) -> (i32, i32) {
    %c0_i32 = arith.constant 0 : i32
    %c0_i32_0 = arith.constant 0 : i32
    %c0_i32_1 = arith.constant 0 : i32
    return %c0_i32, %c0_i32_0 : i32, i32
  }
  func.func @transform_3(%arg0: i32, %arg1: i32) -> (i32, i32) {
    %c0_i32 = arith.constant 0 : i32
    %c0_i32_0 = arith.constant 0 : i32
    return %c0_i32, %arg1 : i32, i32
  }
  func.func @transform_4(%arg0: i32, %arg1: i32) -> (i32, i32) {
    %c0_i32 = arith.constant 0 : i32
    %c0_i32_0 = arith.constant 0 : i32
    return %c0_i32, %arg1 : i32, i32
  }
  func.func @transform_5(%arg0: i32, %arg1: i32) -> (i32, i32) {
    %c0_i32 = arith.constant 0 : i32
    return %arg0, %arg1 : i32, i32
  }
}

</mosaic_0001>

<llo_original>
// kernel: prenorm_linear.1
$region0: #{prenorm_linear.1}
  #allocation0 [shape = 'u32[]', space=smem, size = 0x4, offset = 0x4, fixed_abs, tag = 'smem constant byte address 0x4 - core index']
  #allocation1 [shape = 'u32[144,128]{1,0:T(1,128)}', space=vmem, size = 0x12000, scoped, tag = 'internal scratch']
  #allocation2 [shape = 'f32[16,32]{1,0:T(8,128)}', space=vmem, size = 0x2000, scoped, tag = 'scratch operand']
  %s0 = inlined_call_operand.vmem [shape: f32[16,32], index: 0, kind: input, shape index: {}]
  %s1 = inlined_call_operand.vmem [shape: f32[1,32], index: 1, kind: input, shape index: {}]
  %s2 = inlined_call_operand.vmem [shape: f32[1,32], index: 2, kind: input, shape index: {}]
  %s3 = inlined_call_operand.vmem [shape: f32[32,128], index: 3, kind: input, shape index: {}]
  %s4 = inlined_call_operand.vmem [shape: f32[1,128], index: 4, kind: input, shape index: {}]
  %s5 = inlined_call_operand.hbm [shape: f32[16,128], index: 5, kind: output, shape index: {}]
  %s6 = sld [smem:[#allocation0]]
  $region34: #{prenorm_linear.1} parent=0
    _
  %s8 = ssub.s32 1, %s6
  %s9 = scalar_select 0, %s8, %s6
  $region1: #{prenorm_linear.1} parent=0
    #allocation3 [shape = 'u8[8192]{0}', space=vmem, size = 0x2000, scoped, tag = 'output window, operand 0, single buffered']
    #allocation4 [shape = 's32[1]{0}', space=sflag, size = 0x4, scoped, tag = 'scoped memory for prenorm_linear.1']
    %10 = vsyncpa [#allocation4], 0
    // Predicated region
    $region2: #{prenorm_linear.1} parent=1 // pred_check
      _
    $region3: #{prenorm_linear.1} parent=1 // pred_check_branch
      %12 = sbr.rel (0) target = $region5
    $region4: #{prenorm_linear.1} parent=1 // pred_region
      _
    $region5: #{prenorm_linear.1} parent=1 // pred_fallthru
      _
    // Predicated region
    $region6: #{prenorm_linear.1} parent=1 // pred_check
      _
    $region7: #{prenorm_linear.1} parent=1 // pred_check_branch
      %14 = sbr.rel (0) target = $region9
    $region8: #{prenorm_linear.1} parent=1 // pred_region
      _
    $region9: #{prenorm_linear.1} parent=1 // pred_fallthru
      _
    // Predicated region
    $region10: #{prenorm_linear.1} parent=1 // pred_check
      _
    $region11: #{prenorm_linear.1} parent=1 // pred_check_branch
      %16 = sbr.rel (0) target = $region13
    $region12: #{prenorm_linear.1} parent=1 // pred_region
      _
    $region13: #{prenorm_linear.1} parent=1 // pred_fallthru
      _
    // Predicated region
    $region14: #{prenorm_linear.1} parent=1 // pred_check
      _
    $region15: #{prenorm_linear.1} parent=1 // pred_check_branch
      %18 = sbr.rel (0) target = $region17
    $region16: #{prenorm_linear.1} parent=1 // pred_region
      _
    $region17: #{prenorm_linear.1} parent=1 // pred_fallthru
      _
    // Predicated region
    $region18: #{prenorm_linear.1} parent=1 // pred_check
      _
    $region19: #{prenorm_linear.1} parent=1 // pred_check_branch
      %20 = sbr.rel (0) target = $region21
    $region20: #{prenorm_linear.1} parent=1 // pred_region
      _
    $region21: #{prenorm_linear.1} parent=1 // pred_fallthru
      _
    %p21 = scmp.eq.s32.totalorder 0, 0
    // Predicated region
    $region22: #{prenorm_linear.1} parent=1 // pred_check
      %p22 = pneg %p21
    $region23: #{prenorm_linear.1} parent=1 // pred_check_branch
      %24 = sbr.rel (%p22) target = $region25
    $region24: #{prenorm_linear.1} parent=1 // pred_region
      %v25 = vld [vmem:[%s0] sm:$0xff]
      %v26 = vld [vmem:[%s0 + $0x8] sm:$0xff]
      %vm27 = vcmask 261120
      %v28 = vsel %vm27, %v25, 0.0
      %29 = vadd.xlane.f32.xlu0 %v28
      %v30 = vpop.xlane.xlu0 %29
      %v31 = vsel %vm27, %v26, 0.0
      %32 = vadd.xlane.f32.xlu0 %v31
      %v33 = vpop.xlane.xlu0 %32
      %v34 = vmul.f32 %v25, %v25
      %v35 = vmul.f32 %v26, %v26
      %v36 = vsel %vm27, %v34, 0.0
      %37 = vadd.xlane.f32.xlu0 %v36
      %v38 = vpop.xlane.xlu0 %37
      %v39 = vsel %vm27, %v35, 0.0
      %40 = vadd.xlane.f32.xlu0 %v39
      %v41 = vpop.xlane.xlu0 %40
      %v42 = vmul.f32 %v30, 0.03125
      %v43 = vmul.f32 %v33, 0.03125
      %v44 = vmul.f32 %v38, 0.03125
      %v45 = vmul.f32 %v41, 0.03125
      %v46 = vmul.f32 %v42, %v42
      %v47 = vmul.f32 %v43, %v43
      %v48 = vsub.f32 %v44, %v46
      %v49 = vsub.f32 %v45, %v47
      %v50 = vmax.f32 %v48, 0.0
      %v51 = vmax.f32 %v49, 0.0
      %v52 = vadd.f32 %v50, 1e-05
      %v53 = vadd.f32 %v51, 1e-05
      %v54 = vrsqrt.pop %v52
      %v55 = vrsqrt.pop %v53
      %v56 = vsub.f32 %v25, %v42
      %v57 = vsub.f32 %v26, %v43
      %v58 = vmul.f32 %v56, %v54
      %v59 = vmul.f32 %v57, %v55
      %v60 = vld [vmem:[%s1] sm:$0x1]
      %v62 = vlaneseq
      %v63 = vshrl.u32 %v62, 7
      %v64 = vsub.s32 0, %v63
      %v65 = vrot.slane %v60, %v64
      %v67 = vmul.f32 %v58, %v65
      %v68 = vmul.f32 %v59, %v65
      %v69 = vld [vmem:[%s2] sm:$0x1]
      %v71 = vlaneseq
      %v72 = vshrl.u32 %v71, 7
      %v73 = vsub.s32 0, %v72
      %v74 = vrot.slane %v69, %v73
      %v76 = vadd.f32 %v67, %v74
      %v77 = vadd.f32 %v68, %v74
      %78 = vst.msk [vmem:[#allocation2] sm:$0xff] %vm27, %v76
      %79 = vst.msk [vmem:[#allocation2 + $0x8] sm:$0xff] %vm27, %v77
    $region25: #{prenorm_linear.1} parent=1 // pred_fallthru
      _
    %v80 = vld [vmem:[#allocation2] sm:$0xff]
    %v81 = vld [vmem:[#allocation2 + $0x8] sm:$0xff]
    %v82 = vld [vmem:[%s3] sm:$0xff]
    %v83 = vld [vmem:[%s3 + $0x8] sm:$0xff]
    %v84 = vld [vmem:[%s3 + $0x10] sm:$0xff]
    %v85 = vld [vmem:[%s3 + $0x18] sm:$0xff]
    %v86 = vld [vmem:[%s4] sm:$0x1]
    %v88 = vlaneseq
    %v89 = vshrl.u32 %v88, 7
    %v90 = vsub.s32 0, %v89
    %v91 = vrot.slane %v86, %v90
    %vm93 = vcmask 261120
    %v95 = vsel %vm93, %v80, 0
    %v98 = vsel %vm93, %v81, 0
    %100 = vmatprep.subr.mxu0 0.0
    %101 = vmatpush1.msra.mxu0 %v82
    %102 = vmatprep.subr.mxu0 0.0
    %103 = vmatpush1.msra.mxu0 %v83
    %104 = vmatprep.subr.mxu0 0.0
    %105 = vmatpush1.msra.mxu0 %v84
    %106 = vmatprep.subr.mxu0 0.0
    %107 = vmatpush1.msra.mxu0 %v85
    %108 = vmatprep.subr.mxu0 0.0
    %109 = vmatpush1.msra.mxu0 0.0
    %110 = vmatprep.subr.mxu0 0.0
    %111 = vmatpush1.msra.mxu0 0.0
    %112 = vmatprep.subr.mxu0 0.0
    %113 = vmatpush1.msra.mxu0 0.0
    %114 = vmatprep.subr.mxu0 0.0
    %115 = vmatpush1.msra.mxu0 0.0
    %116 = vmatprep.subr.mxu0 0.0
    %117 = vmatpush1.msra.mxu0 0.0
    %118 = vmatprep.subr.mxu0 0.0
    %119 = vmatpush1.msra.mxu0 0.0
    %120 = vmatprep.subr.mxu0 0.0
    %121 = vmatpush1.msra.mxu0 0.0
    %122 = vmatprep.subr.mxu0 0.0
    %123 = vmatpush1.msra.mxu0 0.0
    %124 = vmatprep.subr.mxu0 0.0
    %125 = vmatpush1.msra.mxu0 0.0
    %126 = vmatprep.subr.mxu0 0.0
    %127 = vmatpush1.msra.mxu0 0.0
    %128 = vmatprep.subr.mxu0 0.0
    %129 = vmatpush1.msra.mxu0 0.0
    %130 = vmatprep.subr.mxu0 0.0
    %131 = vmatpush1.msra.mxu0 0.0
    %132 = vmatprep.subr.mxu0 0.0
    %133 = vmatpush1.msra.mxu0 0.0
    %134 = vmatprep.subr.mxu0 0.0
    %135 = vmatpush1.msra.mxu0 0.0
    %136 = vmatprep.subr.mxu0 0.0
    %137 = vmatpush1.msra.mxu0 0.0
    %138 = vmatprep.subr.mxu0 0.0
    %139 = vmatpush1.msra.mxu0 0.0
    %140 = vmatprep.subr.mxu0 0.0
    %141 = vmatpush1.msra.mxu0 0.0
    %142 = vmatprep.subr.mxu0 0.0
    %143 = vmatpush1.msra.mxu0 0.0
    %144 = vmatprep.subr.mxu0 0.0
    %145 = vmatpush1.msra.mxu0 0.0
    %146 = vmatprep.subr.mxu0 0.0
    %147 = vmatpush1.msra.mxu0 0.0
    %148 = vmatprep.subr.mxu0 0.0
    %149 = vmatpush1.msra.mxu0 0.0
    %150 = vmatprep.subr.mxu0 0.0
    %151 = vmatpush1.msra.mxu0 0.0
    %152 = vmatprep.subr.mxu0 0.0
    %153 = vmatpush1.msra.mxu0 0.0
    %154 = vmatprep.subr.mxu0 0.0
    %155 = vmatpush1.msra.mxu0 0.0
    %156 = vmatprep.subr.mxu0 0.0
    %157 = vmatpush1.msra.mxu0 0.0
    %158 = vmatprep.subr.mxu0 0.0
    %159 = vmatpush1.msra.mxu0 0.0
    %160 = vmatprep.subr.mxu0 0.0
    %161 = vmatpush1.msra.mxu0 0.0
    %162 = vmatprep.subr.mxu0 0.0
    %163 = vmatpush1.msra.mxu0 0.0
    %164 = vmatprep.mubr.f32.mxu0 0.0
    %165 = vmatmul.mubr.f32.gmra.mrb[0].mxu0 %v95
    %v166 = vpop.f32.mrb[0].mxu0
    %v167 = vadd.f32 %v91, %v166
    %v168 = vpop.f32.mrb[0].mxu0
    %169 = vmatprep.mubr.f32.mxu0 0.0
    %170 = vmatmul.mubr.f32.gmra.mrb[0].mxu0 %v98
    %v171 = vpop.f32.mrb[0].mxu0
    %v172 = vadd.f32 %v91, %v171
    %v173 = vpop.f32.mrb[0].mxu0
    %174 = vdwg.mxu0
    %175 = vst [vmem:[#allocation3] sm:$0xff] %v167
    %176 = vst [vmem:[#allocation3 + $0x8] sm:$0xff] %v172
    // Predicated region
    $region26: #{prenorm_linear.1} parent=1 // pred_check
      _
    $region27: #{prenorm_linear.1} parent=1 // pred_check_branch
      %178 = sbr.rel (0) target = $region29
    $region28: #{prenorm_linear.1} parent=1 // pred_region
      %s180 = ssub.s32 256, 256
      %181 = vsyncadd [#allocation4], %s180
      %s182 = sshll.u32 [#allocation3], 4
      %s183 = int_to_ptr.vmem [resolvable:$true] %s182
      %188 = dma.vmem_to_hbm [thread:$0]  %s183, 256, %s5, [#allocation4], 128, 128, 8
    $region29: #{prenorm_linear.1} parent=1 // pred_fallthru
      _
    // Predicated region
    $region30: #{prenorm_linear.1} parent=1 // pred_check
      _
    $region31: #{prenorm_linear.1} parent=1 // pred_check_branch
      %190 = sbr.rel (0) target = $region33
    $region32: #{prenorm_linear.1} parent=1 // pred_region
      %191 = dma.done [#allocation4], 256
    $region33: #{prenorm_linear.1} parent=1 // pred_fallthru
      _
    %192 = vsyncpa [#allocation4], 1

</llo_original>
